<compile_context>
chip_gen: v5e
topology: v5e:2x2
jax: 0.10.0
libtpu: 0.0.40
codegen_flags: <defaults>
</compile_context>

<pallas_src>
import math
import jax
import jax.numpy as jnp
from jax.experimental import pallas as pl
from jax.experimental.pallas import tpu as pltpu


# ----------------------------------------------------------------------------- #
# Fused kernel: encoder + qz0 + Euler-Maruyama SDE + projector/likelihood + KL
# ----------------------------------------------------------------------------- #
def make_fused_kernel(T, B, D, C, L, dt, noise_std):
    eps = 1e-7
    sqrt_dt = math.sqrt(dt)
    log_std = math.log(noise_std)
    half_log_2pi = 0.5 * math.log(2.0 * math.pi)
    inv_var = 1.0 / (noise_std * noise_std)
    inv_b = 1.0 / B

    def kernel(xs_ref, noise_ref, we_ref, be_ref,
               wqc_ref, wqx_ref, bq_ref,
               wcp_ref, wxp_ref, bfh_ref,
               wloop_ref,
               wp_ref, bpj_ref,
               diff_ref, pz0m_ref, pz0ls_ref, inv2varp_ref,
               nlp_ref, dkl_ref):
        xs = xs_ref[...]                                   # (T*B, D) time-major, flat
        noise = noise_ref[...]                             # (T*B, L) std normals

        # ---- encoder for every time step in one MXU pass (hoisted) ----
        enc = jnp.dot(xs, we_ref[...], preferred_element_type=jnp.float32) + be_ref[...]

        # ---- qz0_net(ctx[:, 0, :]) with pre-split weights (aligned operands) ----
        enc0 = enc[0:B]                                    # prefix sublane slices (cheap)
        x0 = xs[0:B]
        qmix = (jnp.dot(enc0, wqc_ref[...], preferred_element_type=jnp.float32)
                + jnp.dot(x0, wqx_ref[...], preferred_element_type=jnp.float32)
                + bq_ref[...])                             # (B, 2L)
        qz0_mean = qmix[:, 0:L]
        qz0_logstd = qmix[:, L:2 * L]
        q_std = jnp.exp(qz0_logstd)                        # reused: sampling AND KL0

        # ---- packed f_net context, hoisted out of the loop (one MXU pass) ----
        # lanes [0,L)  : enc@Wf_c + xs@Wf_x + bf              (-> drift_y context)
        # lanes [L,2L) : same - bh                            (-> drift_y - prior_drift ctx)
        ctx_pack = (jnp.dot(enc, wcp_ref[...], preferred_element_type=jnp.float32)
                    + jnp.dot(xs, wxp_ref[...], preferred_element_type=jnp.float32)
                    + bfh_ref[...])                        # (T*B, 2L)

        # ---- diffusion: safe-divide reciprocal hoisted (no divides in the loop) ----
        diff = diff_ref[...]                               # (1, L)
        safe_den = jnp.where(jnp.abs(diff) > eps, diff,
                             jnp.where(diff >= 0.0, eps, -eps))
        inv_den = 1.0 / safe_den
        inv_den2 = inv_den * inv_den

        # ---- pre-scaled Brownian increments g*dW (single hoisted VPU pass) ----
        g_dw = noise * (diff * sqrt_dt)                    # (T*B, L); rows >= B used below

        # ---- z0 ~ N(qz0_mean, exp(qz0_logstd)) from the pre-generated normals ----
        z = qz0_mean + q_std * noise[0:B]                  # (B, L)
        z_list = [z]                                       # trajectory kept in registers
        acc = jnp.zeros((B, 2 * L), jnp.float32)           # elementwise |numerator|^2 acc

        w_loop = wloop_ref[...]                            # (L, 2L) = [Wf_z | Wf_z - Wh]

        # ---- Euler-Maruyama over the time grid (T is tiny -> static unroll) ----
        # TODO(synk): ctx index k at the step ending at ts[k] mirrors torchsde's
        # searchsorted(ts, t_start, right=True) under exact arithmetic; fp drift in
        # torchsde's internal time accumulation could shift this lookup to k-1.
        for k in range(1, T):
            # single matmul on the serial chain: lanes [0,L)=drift_y, [L,2L)=drift_y-prior
            zz = (jnp.dot(z, w_loop, preferred_element_type=jnp.float32)
                  + ctx_pack[k * B:(k + 1) * B])           # (B, 2L)
            acc = acc + zz * zz                            # deferred KL (no XLU in loop)
            z = z + zz[:, 0:L] * dt + g_dw[k * B:(k + 1) * B]
            z_list.append(z)

        zs_all = jnp.concatenate(z_list, axis=0)           # (T*B, L)

        # ---- projector + Gaussian log-likelihood, one MXU pass over all (t, b) ----
        xhat = (jnp.dot(zs_all, wp_ref[...], preferred_element_type=jnp.float32)
                + bpj_ref[...])                            # (T*B, D)
        resid = xs - xhat
        lp = -0.5 * resid * resid * inv_var - log_std - half_log_2pi
        lp_rows = jnp.sum(lp, axis=-1, keepdims=True)      # (T*B, 1)
        nlp_ref[...] = -jnp.sum(lp_rows, axis=0, keepdims=True) * inv_b   # (1, 1)

        # ---- analytic KL(qz0 || pz0) + path KL (single deferred reduction) ----
        q_var = q_std * q_std
        kl0 = (pz0ls_ref[...] - qz0_logstd
               + (q_var + (qz0_mean - pz0m_ref[...]) ** 2) * inv2varp_ref[...]
               - 0.5)                                      # (B, L)
        # Path KL per (b,l): dt * sum_k num_k^2 / safe_den^2  (module has no 0.5 factor).
        kl_all = kl0 + acc[:, L:2 * L] * (inv_den2 * dt)   # (B, L)
        kl_rows = jnp.sum(kl_all, axis=-1, keepdims=True)  # (B, 1)
        dkl_ref[...] = jnp.sum(kl_rows, axis=0, keepdims=True) * inv_b     # (1, 1)

    return kernel


# ----------------------------------------------------------------------------- #
# Wrapper
# ----------------------------------------------------------------------------- #
def first_order_latent_sde_forward(xs_btd, params, key, noise_std=0.1, dt=0.1):
    B, T, D = xs_btd.shape
    C = params["We"].shape[1]
    L = params["Wh"].shape[0]

    # time-major flat layout: row t*B + b  <->  (time t, batch b)
    # TODO(synk): for realistic B, put batch on the lane (minor) dim instead
    # (carry z as (L,B), shard a leading batch grid axis "parallel" on v7x).
    xs_flat = jnp.transpose(xs_btd, (1, 0, 2)).reshape(T * B, D).astype(jnp.float32)
    # single std-normal block: rows [0,B) -> eps for z0; rows [kB,(k+1)B) -> dW_k/sqrt(dt)
    noise = jax.random.normal(key, (T * B, L), jnp.float32)

    # ---- one-time parameter splitting / packing (keeps in-kernel operands whole) ----
    Wq = params["Wq"]                                      # (C+D, 2L) packed qz0_net
    Wq_c, Wq_x = Wq[:C], Wq[C:C + D]
    Wf = params["Wf"]                                      # (L+C+D, L) packed f_net
    Wf_z, Wf_c, Wf_x = Wf[:L], Wf[L:L + C], Wf[L + C:L + C + D]
    Wh, bh, bf = params["Wh"], params["bh"], params["bf"]
    W_loop = jnp.concatenate([Wf_z, Wf_z - Wh], axis=1)    # (L, 2L) serial-loop weight
    Wc_pack = jnp.concatenate([Wf_c, Wf_c], axis=1)        # (C, 2L)
    Wx_pack = jnp.concatenate([Wf_x, Wf_x], axis=1)        # (D, 2L)
    b_pack = jnp.concatenate([bf, bf - bh], axis=1)        # (1, 2L)
    p_std = jnp.exp(params["pz0_logstd"])
    inv_2var_p = 1.0 / (2.0 * p_std * p_std)               # constant prior term

    full = lambda shape: pl.BlockSpec(shape, lambda i: (0, 0))

    neg_log_pxs, dkl = pl.pallas_call(
        make_fused_kernel(T, B, D, C, L, dt, noise_std),
        out_shape=(jax.ShapeDtypeStruct((1, 1), jnp.float32),
                   jax.ShapeDtypeStruct((1, 1), jnp.float32)),
        grid_spec=pltpu.PrefetchScalarGridSpec(
            num_scalar_prefetch=0,
            grid=(1,),
            in_specs=[full((T * B, D)), full((T * B, L)),
                      full((D, C)), full((1, C)),
                      full((C, 2 * L)), full((D, 2 * L)), full((1, 2 * L)),
                      full((C, 2 * L)), full((D, 2 * L)), full((1, 2 * L)),
                      full((L, 2 * L)),
                      full((L, D)), full((1, D)),
                      full((1, L)), full((1, L)), full((1, L)), full((1, L))],
            out_specs=(full((1, 1)), full((1, 1)))),
        compiler_params=pltpu.CompilerParams(
            dimension_semantics=("arbitrary",)),
    )(xs_flat, noise, params["We"], params["be"],
      Wq_c, Wq_x, params["bq"],
      Wc_pack, Wx_pack, b_pack,
      W_loop,
      params["Wp"], params["bp"],
      params["diffusion"], params["pz0_mean"], params["pz0_logstd"], inv_2var_p)

    return neg_log_pxs[0, 0], dkl[0, 0]


# ----------------------------------------------------------------------------- #
# Deterministic synthetic parameters + example run
# ----------------------------------------------------------------------------- #
def init_params(key, data_size, latent_size, context_size):
    D, L, C = data_size, latent_size, context_size
    ks = jax.random.split(key, 8)
    s = 0.1
    beta = 1.0 / 3.0
    gamma = jnp.ones((1, L), jnp.float32)
    return {
        "We": s * jax.random.normal(ks[0], (D, C), jnp.float32),          # encoder
        "be": jnp.zeros((1, C), jnp.float32),
        "Wq": s * jax.random.normal(ks[1], (C + D, 2 * L), jnp.float32),  # qz0_net (packed)
        "bq": jnp.zeros((1, 2 * L), jnp.float32),
        "Wf": s * jax.random.normal(ks[2], (L + C + D, L), jnp.float32),  # f_net (q_net, packed)
        "bf": jnp.zeros((1, L), jnp.float32),
        "Wh": s * jax.random.normal(ks[3], (L, L), jnp.float32),          # h_net (p_net)
        "bh": jnp.zeros((1, L), jnp.float32),
        "Wp": s * jax.random.normal(ks[4], (L, D), jnp.float32),          # projector
        "bp": jnp.zeros((1, D), jnp.float32),
        "pz0_mean": jnp.zeros((1, L), jnp.float32),
        "pz0_logstd": jnp.zeros((1, L), jnp.float32),
        "diffusion": jnp.sqrt(2.0 / (beta * gamma)),                      # sqrt(2/(beta*gamma))
    }


if __name__ == "__main__":
    B, T, D, C, L = 4, 8, 6, 10, 8   # batch, time, data, context, latent
    # TODO(synk): hidden_size of the injected q_net/p_net/encoder is unused — they
    # are instantiated as single Linear layers here (synthetic dependency choice).
    key = jax.random.PRNGKey(0)
    k_data, k_param, k_noise = jax.random.split(key, 3)

    xs = jax.random.normal(k_data, (B, T, D), jnp.float32)        # (batch, time, channels)
    params = init_params(k_param, D, L, C)

    neg_log_pxs, dkl = first_order_latent_sde_forward(
        xs, params, k_noise, noise_std=0.1, dt=0.1)
    jax.block_until_ready((neg_log_pxs, dkl))
    print("KERNEL_OK")
</pallas_src>

<mosaic_0001>
module attributes {stable_mosaic.version = 11 : i64} {
  func.func @kernel(%arg0: i32, %arg1: memref<32x6xf32, #tpu.memory_space<vmem>>, %arg2: memref<32x8xf32, #tpu.memory_space<vmem>>, %arg3: memref<6x10xf32, #tpu.memory_space<vmem>>, %arg4: memref<1x10xf32, #tpu.memory_space<vmem>>, %arg5: memref<10x16xf32, #tpu.memory_space<vmem>>, %arg6: memref<6x16xf32, #tpu.memory_space<vmem>>, %arg7: memref<1x16xf32, #tpu.memory_space<vmem>>, %arg8: memref<10x16xf32, #tpu.memory_space<vmem>>, %arg9: memref<6x16xf32, #tpu.memory_space<vmem>>, %arg10: memref<1x16xf32, #tpu.memory_space<vmem>>, %arg11: memref<8x16xf32, #tpu.memory_space<vmem>>, %arg12: memref<8x6xf32, #tpu.memory_space<vmem>>, %arg13: memref<1x6xf32, #tpu.memory_space<vmem>>, %arg14: memref<1x8xf32, #tpu.memory_space<vmem>>, %arg15: memref<1x8xf32, #tpu.memory_space<vmem>>, %arg16: memref<1x8xf32, #tpu.memory_space<vmem>>, %arg17: memref<1x8xf32, #tpu.memory_space<vmem>>, %arg18: memref<1x1xf32, #tpu.memory_space<vmem>>, %arg19: memref<1x1xf32, #tpu.memory_space<vmem>>) attributes {dimension_semantics = [#tpu.dimension_semantics<arbitrary>], iteration_bounds = array<i64: 1>, scalar_prefetch = 0 : i64, scratch_operands = 0 : i64, tpu.core_type = #tpu.core_type<tc>, window_params = [{pipeline_mode = #tpu.pipeline_mode<synchronous>, transform_indices = @transform_0, window_bounds = array<i64: 32, 6>}, {pipeline_mode = #tpu.pipeline_mode<synchronous>, transform_indices = @transform_1, window_bounds = array<i64: 32, 8>}, {pipeline_mode = #tpu.pipeline_mode<synchronous>, transform_indices = @transform_2, window_bounds = array<i64: 6, 10>}, {pipeline_mode = #tpu.pipeline_mode<synchronous>, transform_indices = @transform_3, window_bounds = array<i64: 1, 10>}, {pipeline_mode = #tpu.pipeline_mode<synchronous>, transform_indices = @transform_4, window_bounds = array<i64: 10, 16>}, {pipeline_mode = #tpu.pipeline_mode<synchronous>, transform_indices = @transform_5, window_bounds = array<i64: 6, 16>}, {pipeline_mode = #tpu.pipeline_mode<synchronous>, transform_indices = @transform_6, window_bounds = array<i64: 1, 16>}, {pipeline_mode = #tpu.pipeline_mode<synchronous>, transform_indices = @transform_7, window_bounds = array<i64: 10, 16>}, {pipeline_mode = #tpu.pipeline_mode<synchronous>, transform_indices = @transform_8, window_bounds = array<i64: 6, 16>}, {pipeline_mode = #tpu.pipeline_mode<synchronous>, transform_indices = @transform_9, window_bounds = array<i64: 1, 16>}, {pipeline_mode = #tpu.pipeline_mode<synchronous>, transform_indices = @transform_10, window_bounds = array<i64: 8, 16>}, {pipeline_mode = #tpu.pipeline_mode<synchronous>, transform_indices = @transform_11, window_bounds = array<i64: 8, 6>}, {pipeline_mode = #tpu.pipeline_mode<synchronous>, transform_indices = @transform_12, window_bounds = array<i64: 1, 6>}, {pipeline_mode = #tpu.pipeline_mode<synchronous>, transform_indices = @transform_13, window_bounds = array<i64: 1, 8>}, {pipeline_mode = #tpu.pipeline_mode<synchronous>, transform_indices = @transform_14, window_bounds = array<i64: 1, 8>}, {pipeline_mode = #tpu.pipeline_mode<synchronous>, transform_indices = @transform_15, window_bounds = array<i64: 1, 8>}, {pipeline_mode = #tpu.pipeline_mode<synchronous>, transform_indices = @transform_16, window_bounds = array<i64: 1, 8>}, {pipeline_mode = #tpu.pipeline_mode<synchronous>, transform_indices = @transform_17, window_bounds = array<i64: 1, 1>}, {pipeline_mode = #tpu.pipeline_mode<synchronous>, transform_indices = @transform_18, window_bounds = array<i64: 1, 1>}]} {
    %c0 = arith.constant 0 : index
    %c0_0 = arith.constant 0 : index
    %0 = vector.load %arg1[%c0, %c0_0] : memref<32x6xf32, #tpu.memory_space<vmem>>, vector<32x6xf32>
    %c0_1 = arith.constant 0 : index
    %c0_2 = arith.constant 0 : index
    %1 = vector.load %arg2[%c0_1, %c0_2] : memref<32x8xf32, #tpu.memory_space<vmem>>, vector<32x8xf32>
    %c0_3 = arith.constant 0 : index
    %c0_4 = arith.constant 0 : index
    %2 = vector.load %arg3[%c0_3, %c0_4] : memref<6x10xf32, #tpu.memory_space<vmem>>, vector<6x10xf32>
    %cst = arith.constant dense<0.000000e+00> : vector<32x10xf32>
    %3 = tpu.matmul %0, %2, %cst {dimension_numbers = #tpu.dot_dimension_numbers<[1], [0], [0], [1], [0, 0, 1, 1], [], []>} : vector<32x6xf32>, vector<6x10xf32>, vector<32x10xf32> -> vector<32x10xf32>
    %c0_5 = arith.constant 0 : index
    %c0_6 = arith.constant 0 : index
    %4 = vector.load %arg4[%c0_5, %c0_6] : memref<1x10xf32, #tpu.memory_space<vmem>>, vector<1x10xf32>
    %5 = vector.broadcast %4 : vector<1x10xf32> to vector<32x10xf32>
    %6 = arith.addf %3, %5 : vector<32x10xf32>
    %7 = vector.extract_strided_slice %6 {offsets = [0, 0], sizes = [4, 10], strides = [1, 1]} : vector<32x10xf32> to vector<4x10xf32>
    %8 = vector.extract_strided_slice %0 {offsets = [0, 0], sizes = [4, 6], strides = [1, 1]} : vector<32x6xf32> to vector<4x6xf32>
    %c0_7 = arith.constant 0 : index
    %c0_8 = arith.constant 0 : index
    %9 = vector.load %arg5[%c0_7, %c0_8] : memref<10x16xf32, #tpu.memory_space<vmem>>, vector<10x16xf32>
    %cst_9 = arith.constant dense<0.000000e+00> : vector<4x16xf32>
    %10 = tpu.matmul %7, %9, %cst_9 {dimension_numbers = #tpu.dot_dimension_numbers<[1], [0], [0], [1], [0, 0, 1, 1], [], []>} : vector<4x10xf32>, vector<10x16xf32>, vector<4x16xf32> -> vector<4x16xf32>
    %c0_10 = arith.constant 0 : index
    %c0_11 = arith.constant 0 : index
    %11 = vector.load %arg6[%c0_10, %c0_11] : memref<6x16xf32, #tpu.memory_space<vmem>>, vector<6x16xf32>
    %cst_12 = arith.constant dense<0.000000e+00> : vector<4x16xf32>
    %12 = tpu.matmul %8, %11, %cst_12 {dimension_numbers = #tpu.dot_dimension_numbers<[1], [0], [0], [1], [0, 0, 1, 1], [], []>} : vector<4x6xf32>, vector<6x16xf32>, vector<4x16xf32> -> vector<4x16xf32>
    %13 = arith.addf %10, %12 : vector<4x16xf32>
    %c0_13 = arith.constant 0 : index
    %c0_14 = arith.constant 0 : index
    %14 = vector.load %arg7[%c0_13, %c0_14] : memref<1x16xf32, #tpu.memory_space<vmem>>, vector<1x16xf32>
    %15 = vector.broadcast %14 : vector<1x16xf32> to vector<4x16xf32>
    %16 = arith.addf %13, %15 : vector<4x16xf32>
    %17 = vector.extract_strided_slice %16 {offsets = [0, 0], sizes = [4, 8], strides = [1, 1]} : vector<4x16xf32> to vector<4x8xf32>
    %18 = vector.extract_strided_slice %16 {offsets = [0, 8], sizes = [4, 8], strides = [1, 1]} : vector<4x16xf32> to vector<4x8xf32>
    %19 = math.exp %18 : vector<4x8xf32>
    %c0_15 = arith.constant 0 : index
    %c0_16 = arith.constant 0 : index
    %20 = vector.load %arg8[%c0_15, %c0_16] : memref<10x16xf32, #tpu.memory_space<vmem>>, vector<10x16xf32>
    %cst_17 = arith.constant dense<0.000000e+00> : vector<32x16xf32>
    %21 = tpu.matmul %6, %20, %cst_17 {dimension_numbers = #tpu.dot_dimension_numbers<[1], [0], [0], [1], [0, 0, 1, 1], [], []>} : vector<32x10xf32>, vector<10x16xf32>, vector<32x16xf32> -> vector<32x16xf32>
    %c0_18 = arith.constant 0 : index
    %c0_19 = arith.constant 0 : index
    %22 = vector.load %arg9[%c0_18, %c0_19] : memref<6x16xf32, #tpu.memory_space<vmem>>, vector<6x16xf32>
    %cst_20 = arith.constant dense<0.000000e+00> : vector<32x16xf32>
    %23 = tpu.matmul %0, %22, %cst_20 {dimension_numbers = #tpu.dot_dimension_numbers<[1], [0], [0], [1], [0, 0, 1, 1], [], []>} : vector<32x6xf32>, vector<6x16xf32>, vector<32x16xf32> -> vector<32x16xf32>
    %24 = arith.addf %21, %23 : vector<32x16xf32>
    %c0_21 = arith.constant 0 : index
    %c0_22 = arith.constant 0 : index
    %25 = vector.load %arg10[%c0_21, %c0_22] : memref<1x16xf32, #tpu.memory_space<vmem>>, vector<1x16xf32>
    %26 = vector.broadcast %25 : vector<1x16xf32> to vector<32x16xf32>
    %27 = arith.addf %24, %26 : vector<32x16xf32>
    %c0_23 = arith.constant 0 : index
    %c0_24 = arith.constant 0 : index
    %28 = vector.load %arg14[%c0_23, %c0_24] : memref<1x8xf32, #tpu.memory_space<vmem>>, vector<1x8xf32>
    %29 = math.absf %28 : vector<1x8xf32>
    %cst_25 = arith.constant 1.000000e-07 : f32
    %30 = vector.broadcast %cst_25 : f32 to vector<1x8xf32>
    %31 = arith.cmpf ogt, %29, %30 : vector<1x8xf32>
    %cst_26 = arith.constant 0.000000e+00 : f32
    %32 = vector.broadcast %cst_26 : f32 to vector<1x8xf32>
    %33 = arith.cmpf oge, %28, %32 : vector<1x8xf32>
    %cst_27 = arith.constant 1.000000e-07 : f32
    %cst_28 = arith.constant -1.000000e-07 : f32
    %34 = vector.broadcast %cst_27 : f32 to vector<1x8xf32>
    %35 = vector.broadcast %cst_28 : f32 to vector<1x8xf32>
    %36 = arith.select %33, %34, %35 : vector<1x8xi1>, vector<1x8xf32>
    %37 = arith.select %31, %28, %36 : vector<1x8xi1>, vector<1x8xf32>
    %cst_29 = arith.constant 1.000000e+00 : f32
    %38 = vector.broadcast %cst_29 : f32 to vector<1x8xf32>
    %39 = arith.divf %38, %37 : vector<1x8xf32>
    %40 = arith.mulf %39, %39 : vector<1x8xf32>
    %cst_30 = arith.constant 0.316227764 : f32
    %41 = vector.broadcast %cst_30 : f32 to vector<1x8xf32>
    %42 = arith.mulf %28, %41 : vector<1x8xf32>
    %43 = vector.broadcast %42 : vector<1x8xf32> to vector<32x8xf32>
    %44 = arith.mulf %1, %43 : vector<32x8xf32>
    %45 = vector.extract_strided_slice %1 {offsets = [0, 0], sizes = [4, 8], strides = [1, 1]} : vector<32x8xf32> to vector<4x8xf32>
    %46 = arith.mulf %19, %45 : vector<4x8xf32>
    %47 = arith.addf %17, %46 : vector<4x8xf32>
    %cst_31 = arith.constant 0.000000e+00 : f32
    %48 = vector.broadcast %cst_31 : f32 to vector<4x16xf32>
    %c0_32 = arith.constant 0 : index
    %c0_33 = arith.constant 0 : index
    %49 = vector.load %arg11[%c0_32, %c0_33] : memref<8x16xf32, #tpu.memory_space<vmem>>, vector<8x16xf32>
    %cst_34 = arith.constant dense<0.000000e+00> : vector<4x16xf32>
    %50 = tpu.matmul %47, %49, %cst_34 {dimension_numbers = #tpu.dot_dimension_numbers<[1], [0], [0], [1], [0, 0, 1, 1], [], []>} : vector<4x8xf32>, vector<8x16xf32>, vector<4x16xf32> -> vector<4x16xf32>
    %51 = vector.extract_strided_slice %27 {offsets = [4, 0], sizes = [4, 16], strides = [1, 1]} : vector<32x16xf32> to vector<4x16xf32>
    %52 = arith.addf %50, %51 : vector<4x16xf32>
    %53 = arith.mulf %52, %52 : vector<4x16xf32>
    %54 = arith.addf %48, %53 : vector<4x16xf32>
    %55 = vector.extract_strided_slice %52 {offsets = [0, 0], sizes = [4, 8], strides = [1, 1]} : vector<4x16xf32> to vector<4x8xf32>
    %cst_35 = arith.constant 1.000000e-01 : f32
    %56 = vector.broadcast %cst_35 : f32 to vector<4x8xf32>
    %57 = arith.mulf %55, %56 : vector<4x8xf32>
    %58 = arith.addf %47, %57 : vector<4x8xf32>
    %59 = vector.extract_strided_slice %44 {offsets = [4, 0], sizes = [4, 8], strides = [1, 1]} : vector<32x8xf32> to vector<4x8xf32>
    %60 = arith.addf %58, %59 : vector<4x8xf32>
    %cst_36 = arith.constant dense<0.000000e+00> : vector<4x16xf32>
    %61 = tpu.matmul %60, %49, %cst_36 {dimension_numbers = #tpu.dot_dimension_numbers<[1], [0], [0], [1], [0, 0, 1, 1], [], []>} : vector<4x8xf32>, vector<8x16xf32>, vector<4x16xf32> -> vector<4x16xf32>
    %62 = vector.extract_strided_slice %27 {offsets = [8, 0], sizes = [4, 16], strides = [1, 1]} : vector<32x16xf32> to vector<4x16xf32>
    %63 = arith.addf %61, %62 : vector<4x16xf32>
    %64 = arith.mulf %63, %63 : vector<4x16xf32>
    %65 = arith.addf %54, %64 : vector<4x16xf32>
    %66 = vector.extract_strided_slice %63 {offsets = [0, 0], sizes = [4, 8], strides = [1, 1]} : vector<4x16xf32> to vector<4x8xf32>
    %cst_37 = arith.constant 1.000000e-01 : f32
    %67 = vector.broadcast %cst_37 : f32 to vector<4x8xf32>
    %68 = arith.mulf %66, %67 : vector<4x8xf32>
    %69 = arith.addf %60, %68 : vector<4x8xf32>
    %70 = vector.extract_strided_slice %44 {offsets = [8, 0], sizes = [4, 8], strides = [1, 1]} : vector<32x8xf32> to vector<4x8xf32>
    %71 = arith.addf %69, %70 : vector<4x8xf32>
    %cst_38 = arith.constant dense<0.000000e+00> : vector<4x16xf32>
    %72 = tpu.matmul %71, %49, %cst_38 {dimension_numbers = #tpu.dot_dimension_numbers<[1], [0], [0], [1], [0, 0, 1, 1], [], []>} : vector<4x8xf32>, vector<8x16xf32>, vector<4x16xf32> -> vector<4x16xf32>
    %73 = vector.extract_strided_slice %27 {offsets = [12, 0], sizes = [4, 16], strides = [1, 1]} : vector<32x16xf32> to vector<4x16xf32>
    %74 = arith.addf %72, %73 : vector<4x16xf32>
    %75 = arith.mulf %74, %74 : vector<4x16xf32>
    %76 = arith.addf %65, %75 : vector<4x16xf32>
    %77 = vector.extract_strided_slice %74 {offsets = [0, 0], sizes = [4, 8], strides = [1, 1]} : vector<4x16xf32> to vector<4x8xf32>
    %cst_39 = arith.constant 1.000000e-01 : f32
    %78 = vector.broadcast %cst_39 : f32 to vector<4x8xf32>
    %79 = arith.mulf %77, %78 : vector<4x8xf32>
    %80 = arith.addf %71, %79 : vector<4x8xf32>
    %81 = vector.extract_strided_slice %44 {offsets = [12, 0], sizes = [4, 8], strides = [1, 1]} : vector<32x8xf32> to vector<4x8xf32>
    %82 = arith.addf %80, %81 : vector<4x8xf32>
    %cst_40 = arith.constant dense<0.000000e+00> : vector<4x16xf32>
    %83 = tpu.matmul %82, %49, %cst_40 {dimension_numbers = #tpu.dot_dimension_numbers<[1], [0], [0], [1], [0, 0, 1, 1], [], []>} : vector<4x8xf32>, vector<8x16xf32>, vector<4x16xf32> -> vector<4x16xf32>
    %84 = vector.extract_strided_slice %27 {offsets = [16, 0], sizes = [4, 16], strides = [1, 1]} : vector<32x16xf32> to vector<4x16xf32>
    %85 = arith.addf %83, %84 : vector<4x16xf32>
    %86 = arith.mulf %85, %85 : vector<4x16xf32>
    %87 = arith.addf %76, %86 : vector<4x16xf32>
    %88 = vector.extract_strided_slice %85 {offsets = [0, 0], sizes = [4, 8], strides = [1, 1]} : vector<4x16xf32> to vector<4x8xf32>
    %cst_41 = arith.constant 1.000000e-01 : f32
    %89 = vector.broadcast %cst_41 : f32 to vector<4x8xf32>
    %90 = arith.mulf %88, %89 : vector<4x8xf32>
    %91 = arith.addf %82, %90 : vector<4x8xf32>
    %92 = vector.extract_strided_slice %44 {offsets = [16, 0], sizes = [4, 8], strides = [1, 1]} : vector<32x8xf32> to vector<4x8xf32>
    %93 = arith.addf %91, %92 : vector<4x8xf32>
    %cst_42 = arith.constant dense<0.000000e+00> : vector<4x16xf32>
    %94 = tpu.matmul %93, %49, %cst_42 {dimension_numbers = #tpu.dot_dimension_numbers<[1], [0], [0], [1], [0, 0, 1, 1], [], []>} : vector<4x8xf32>, vector<8x16xf32>, vector<4x16xf32> -> vector<4x16xf32>
    %95 = vector.extract_strided_slice %27 {offsets = [20, 0], sizes = [4, 16], strides = [1, 1]} : vector<32x16xf32> to vector<4x16xf32>
    %96 = arith.addf %94, %95 : vector<4x16xf32>
    %97 = arith.mulf %96, %96 : vector<4x16xf32>
    %98 = arith.addf %87, %97 : vector<4x16xf32>
    %99 = vector.extract_strided_slice %96 {offsets = [0, 0], sizes = [4, 8], strides = [1, 1]} : vector<4x16xf32> to vector<4x8xf32>
    %cst_43 = arith.constant 1.000000e-01 : f32
    %100 = vector.broadcast %cst_43 : f32 to vector<4x8xf32>
    %101 = arith.mulf %99, %100 : vector<4x8xf32>
    %102 = arith.addf %93, %101 : vector<4x8xf32>
    %103 = vector.extract_strided_slice %44 {offsets = [20, 0], sizes = [4, 8], strides = [1, 1]} : vector<32x8xf32> to vector<4x8xf32>
    %104 = arith.addf %102, %103 : vector<4x8xf32>
    %cst_44 = arith.constant dense<0.000000e+00> : vector<4x16xf32>
    %105 = tpu.matmul %104, %49, %cst_44 {dimension_numbers = #tpu.dot_dimension_numbers<[1], [0], [0], [1], [0, 0, 1, 1], [], []>} : vector<4x8xf32>, vector<8x16xf32>, vector<4x16xf32> -> vector<4x16xf32>
    %106 = vector.extract_strided_slice %27 {offsets = [24, 0], sizes = [4, 16], strides = [1, 1]} : vector<32x16xf32> to vector<4x16xf32>
    %107 = arith.addf %105, %106 : vector<4x16xf32>
    %108 = arith.mulf %107, %107 : vector<4x16xf32>
    %109 = arith.addf %98, %108 : vector<4x16xf32>
    %110 = vector.extract_strided_slice %107 {offsets = [0, 0], sizes = [4, 8], strides = [1, 1]} : vector<4x16xf32> to vector<4x8xf32>
    %cst_45 = arith.constant 1.000000e-01 : f32
    %111 = vector.broadcast %cst_45 : f32 to vector<4x8xf32>
    %112 = arith.mulf %110, %111 : vector<4x8xf32>
    %113 = arith.addf %104, %112 : vector<4x8xf32>
    %114 = vector.extract_strided_slice %44 {offsets = [24, 0], sizes = [4, 8], strides = [1, 1]} : vector<32x8xf32> to vector<4x8xf32>
    %115 = arith.addf %113, %114 : vector<4x8xf32>
    %cst_46 = arith.constant dense<0.000000e+00> : vector<4x16xf32>
    %116 = tpu.matmul %115, %49, %cst_46 {dimension_numbers = #tpu.dot_dimension_numbers<[1], [0], [0], [1], [0, 0, 1, 1], [], []>} : vector<4x8xf32>, vector<8x16xf32>, vector<4x16xf32> -> vector<4x16xf32>
    %117 = vector.extract_strided_slice %27 {offsets = [28, 0], sizes = [4, 16], strides = [1, 1]} : vector<32x16xf32> to vector<4x16xf32>
    %118 = arith.addf %116, %117 : vector<4x16xf32>
    %119 = arith.mulf %118, %118 : vector<4x16xf32>
    %120 = arith.addf %109, %119 : vector<4x16xf32>
    %121 = vector.extract_strided_slice %118 {offsets = [0, 0], sizes = [4, 8], strides = [1, 1]} : vector<4x16xf32> to vector<4x8xf32>
    %cst_47 = arith.constant 1.000000e-01 : f32
    %122 = vector.broadcast %cst_47 : f32 to vector<4x8xf32>
    %123 = arith.mulf %121, %122 : vector<4x8xf32>
    %124 = arith.addf %115, %123 : vector<4x8xf32>
    %125 = vector.extract_strided_slice %44 {offsets = [28, 0], sizes = [4, 8], strides = [1, 1]} : vector<32x8xf32> to vector<4x8xf32>
    %126 = arith.addf %124, %125 : vector<4x8xf32>
    %127 = tpu.concatenate %47, %60, %71, %82, %93, %104, %115, %126 in 0 : vector<4x8xf32>, vector<4x8xf32>, vector<4x8xf32>, vector<4x8xf32>, vector<4x8xf32>, vector<4x8xf32>, vector<4x8xf32>, vector<4x8xf32> -> vector<32x8xf32>
    %c0_48 = arith.constant 0 : index
    %c0_49 = arith.constant 0 : index
    %128 = vector.load %arg12[%c0_48, %c0_49] : memref<8x6xf32, #tpu.memory_space<vmem>>, vector<8x6xf32>
    %cst_50 = arith.constant dense<0.000000e+00> : vector<32x6xf32>
    %129 = tpu.matmul %127, %128, %cst_50 {dimension_numbers = #tpu.dot_dimension_numbers<[1], [0], [0], [1], [0, 0, 1, 1], [], []>} : vector<32x8xf32>, vector<8x6xf32>, vector<32x6xf32> -> vector<32x6xf32>
    %c0_51 = arith.constant 0 : index
    %c0_52 = arith.constant 0 : index
    %130 = vector.load %arg13[%c0_51, %c0_52] : memref<1x6xf32, #tpu.memory_space<vmem>>, vector<1x6xf32>
    %131 = vector.broadcast %130 : vector<1x6xf32> to vector<32x6xf32>
    %132 = arith.addf %129, %131 : vector<32x6xf32>
    %133 = arith.subf %0, %132 : vector<32x6xf32>
    %cst_53 = arith.constant -5.000000e-01 : f32
    %134 = vector.broadcast %cst_53 : f32 to vector<32x6xf32>
    %135 = arith.mulf %134, %133 : vector<32x6xf32>
    %136 = arith.mulf %135, %133 : vector<32x6xf32>
    %cst_54 = arith.constant 1.000000e+02 : f32
    %137 = vector.broadcast %cst_54 : f32 to vector<32x6xf32>
    %138 = arith.mulf %136, %137 : vector<32x6xf32>
    %cst_55 = arith.constant -2.30258512 : f32
    %139 = vector.broadcast %cst_55 : f32 to vector<32x6xf32>
    %140 = arith.subf %138, %139 : vector<32x6xf32>
    %cst_56 = arith.constant 0.918938517 : f32
    %141 = vector.broadcast %cst_56 : f32 to vector<32x6xf32>
    %142 = arith.subf %140, %141 : vector<32x6xf32>
    %cst_57 = arith.constant dense<0.000000e+00> : vector<32xf32>
    %143 = vector.multi_reduction <add>, %142, %cst_57 [1] : vector<32x6xf32> to vector<32xf32>
    %144 = vector.shape_cast %143 : vector<32xf32> to vector<32x1xf32>
    %cst_58 = arith.constant dense<0.000000e+00> : vector<1xf32>
    %145 = vector.multi_reduction <add>, %144, %cst_58 [0] : vector<32x1xf32> to vector<1xf32>
    %146 = vector.shape_cast %145 : vector<1xf32> to vector<1x1xf32>
    %cst_59 = arith.constant 0.000000e+00 : f32
    %147 = vector.broadcast %cst_59 : f32 to vector<1x1xf32>
    %148 = arith.subf %147, %146 : vector<1x1xf32>
    %cst_60 = arith.constant 2.500000e-01 : f32
    %149 = vector.broadcast %cst_60 : f32 to vector<1x1xf32>
    %150 = arith.mulf %148, %149 : vector<1x1xf32>
    %c0_61 = arith.constant 0 : index
    %c0_62 = arith.constant 0 : index
    %151 = vector.load %arg18[%c0_61, %c0_62] : memref<1x1xf32, #tpu.memory_space<vmem>>, vector<1x1xf32>
    tpu.vector_store %arg18[%c0_61, %c0_62], %150 {strides = array<i32>} : memref<1x1xf32, #tpu.memory_space<vmem>>, vector<1x1xf32>,
    %152 = arith.mulf %19, %19 : vector<4x8xf32>
    %c0_63 = arith.constant 0 : index
    %c0_64 = arith.constant 0 : index
    %153 = vector.load %arg16[%c0_63, %c0_64] : memref<1x8xf32, #tpu.memory_space<vmem>>, vector<1x8xf32>
    %154 = vector.broadcast %153 : vector<1x8xf32> to vector<4x8xf32>
    %155 = arith.subf %154, %18 : vector<4x8xf32>
    %c0_65 = arith.constant 0 : index
    %c0_66 = arith.constant 0 : index
    %156 = vector.load %arg15[%c0_65, %c0_66] : memref<1x8xf32, #tpu.memory_space<vmem>>, vector<1x8xf32>
    %157 = vector.broadcast %156 : vector<1x8xf32> to vector<4x8xf32>
    %158 = arith.subf %17, %157 : vector<4x8xf32>
    %159 = arith.mulf %158, %158 : vector<4x8xf32>
    %160 = arith.addf %152, %159 : vector<4x8xf32>
    %c0_67 = arith.constant 0 : index
    %c0_68 = arith.constant 0 : index
    %161 = vector.load %arg17[%c0_67, %c0_68] : memref<1x8xf32, #tpu.memory_space<vmem>>, vector<1x8xf32>
    %162 = vector.broadcast %161 : vector<1x8xf32> to vector<4x8xf32>
    %163 = arith.mulf %160, %162 : vector<4x8xf32>
    %164 = arith.addf %155, %163 : vector<4x8xf32>
    %cst_69 = arith.constant 5.000000e-01 : f32
    %165 = vector.broadcast %cst_69 : f32 to vector<4x8xf32>
    %166 = arith.subf %164, %165 : vector<4x8xf32>
    %167 = vector.extract_strided_slice %120 {offsets = [0, 8], sizes = [4, 8], strides = [1, 1]} : vector<4x16xf32> to vector<4x8xf32>
    %cst_70 = arith.constant 1.000000e-01 : f32
    %168 = vector.broadcast %cst_70 : f32 to vector<1x8xf32>
    %169 = arith.mulf %40, %168 : vector<1x8xf32>
    %170 = vector.broadcast %169 : vector<1x8xf32> to vector<4x8xf32>
    %171 = arith.mulf %167, %170 : vector<4x8xf32>
    %172 = arith.addf %166, %171 : vector<4x8xf32>
    %cst_71 = arith.constant dense<0.000000e+00> : vector<4xf32>
    %173 = vector.multi_reduction <add>, %172, %cst_71 [1] : vector<4x8xf32> to vector<4xf32>
    %174 = vector.shape_cast %173 : vector<4xf32> to vector<4x1xf32>
    %cst_72 = arith.constant dense<0.000000e+00> : vector<1xf32>
    %175 = vector.multi_reduction <add>, %174, %cst_72 [0] : vector<4x1xf32> to vector<1xf32>
    %176 = vector.shape_cast %175 : vector<1xf32> to vector<1x1xf32>
    %cst_73 = arith.constant 2.500000e-01 : f32
    %177 = vector.broadcast %cst_73 : f32 to vector<1x1xf32>
    %178 = arith.mulf %176, %177 : vector<1x1xf32>
    %c0_74 = arith.constant 0 : index
    %c0_75 = arith.constant 0 : index
    %179 = vector.load %arg19[%c0_74, %c0_75] : memref<1x1xf32, #tpu.memory_space<vmem>>, vector<1x1xf32>
    tpu.vector_store %arg19[%c0_74, %c0_75], %178 {strides = array<i32>} : memref<1x1xf32, #tpu.memory_space<vmem>>, vector<1x1xf32>,
    return
  }
  func.func @transform_0(%arg0: i32) -> (i32, i32) {
    %c0_i32 = arith.constant 0 : i32
    %c0_i32_0 = arith.constant 0 : i32
    %c0_i32_1 = arith.constant 0 : i32
    return %c0_i32, %c0_i32_0 : i32, i32
  }
  func.func @transform_1(%arg0: i32) -> (i32, i32) {
    %c0_i32 = arith.constant 0 : i32
    %c0_i32_0 = arith.constant 0 : i32
    %c0_i32_1 = arith.constant 0 : i32
    return %c0_i32, %c0_i32_0 : i32, i32
  }
  func.func @transform_2(%arg0: i32) -> (i32, i32) {
    %c0_i32 = arith.constant 0 : i32
    %c0_i32_0 = arith.constant 0 : i32
    %c0_i32_1 = arith.constant 0 : i32
    return %c0_i32, %c0_i32_0 : i32, i32
  }
  func.func @transform_3(%arg0: i32) -> (i32, i32) {
    %c0_i32 = arith.constant 0 : i32
    %c0_i32_0 = arith.constant 0 : i32
    %c0_i32_1 = arith.constant 0 : i32
    return %c0_i32, %c0_i32_0 : i32, i32
  }
  func.func @transform_4(%arg0: i32) -> (i32, i32) {
    %c0_i32 = arith.constant 0 : i32
    %c0_i32_0 = arith.constant 0 : i32
    %c0_i32_1 = arith.constant 0 : i32
    return %c0_i32, %c0_i32_0 : i32, i32
  }
  func.func @transform_5(%arg0: i32) -> (i32, i32) {
    %c0_i32 = arith.constant 0 : i32
    %c0_i32_0 = arith.constant 0 : i32
    %c0_i32_1 = arith.constant 0 : i32
    return %c0_i32, %c0_i32_0 : i32, i32
  }
  func.func @transform_6(%arg0: i32) -> (i32, i32) {
    %c0_i32 = arith.constant 0 : i32
    %c0_i32_0 = arith.constant 0 : i32
    %c0_i32_1 = arith.constant 0 : i32
    return %c0_i32, %c0_i32_0 : i32, i32
  }
  func.func @transform_7(%arg0: i32) -> (i32, i32) {
    %c0_i32 = arith.constant 0 : i32
    %c0_i32_0 = arith.constant 0 : i32
    %c0_i32_1 = arith.constant 0 : i32
    return %c0_i32, %c0_i32_0 : i32, i32
  }
  func.func @transform_8(%arg0: i32) -> (i32, i32) {
    %c0_i32 = arith.constant 0 : i32
    %c0_i32_0 = arith.constant 0 : i32
    %c0_i32_1 = arith.constant 0 : i32
    return %c0_i32, %c0_i32_0 : i32, i32
  }
  func.func @transform_9(%arg0: i32) -> (i32, i32) {
    %c0_i32 = arith.constant 0 : i32
    %c0_i32_0 = arith.constant 0 : i32
    %c0_i32_1 = arith.constant 0 : i32
    return %c0_i32, %c0_i32_0 : i32, i32
  }
  func.func @transform_10(%arg0: i32) -> (i32, i32) {
    %c0_i32 = arith.constant 0 : i32
    %c0_i32_0 = arith.constant 0 : i32
    %c0_i32_1 = arith.constant 0 : i32
    return %c0_i32, %c0_i32_0 : i32, i32
  }
  func.func @transform_11(%arg0: i32) -> (i32, i32) {
    %c0_i32 = arith.constant 0 : i32
    %c0_i32_0 = arith.constant 0 : i32
    %c0_i32_1 = arith.constant 0 : i32
    return %c0_i32, %c0_i32_0 : i32, i32
  }
  func.func @transform_12(%arg0: i32) -> (i32, i32) {
    %c0_i32 = arith.constant 0 : i32
    %c0_i32_0 = arith.constant 0 : i32
    %c0_i32_1 = arith.constant 0 : i32
    return %c0_i32, %c0_i32_0 : i32, i32
  }
  func.func @transform_13(%arg0: i32) -> (i32, i32) {
    %c0_i32 = arith.constant 0 : i32
    %c0_i32_0 = arith.constant 0 : i32
    %c0_i32_1 = arith.constant 0 : i32
    return %c0_i32, %c0_i32_0 : i32, i32
  }
  func.func @transform_14(%arg0: i32) -> (i32, i32) {
    %c0_i32 = arith.constant 0 : i32
    %c0_i32_0 = arith.constant 0 : i32
    %c0_i32_1 = arith.constant 0 : i32
    return %c0_i32, %c0_i32_0 : i32, i32
  }
  func.func @transform_15(%arg0: i32) -> (i32, i32) {
    %c0_i32 = arith.constant 0 : i32
    %c0_i32_0 = arith.constant 0 : i32
    %c0_i32_1 = arith.constant 0 : i32
    return %c0_i32, %c0_i32_0 : i32, i32
  }
  func.func @transform_16(%arg0: i32) -> (i32, i32) {
    %c0_i32 = arith.constant 0 : i32
    %c0_i32_0 = arith.constant 0 : i32
    %c0_i32_1 = arith.constant 0 : i32
    return %c0_i32, %c0_i32_0 : i32, i32
  }
  func.func @transform_17(%arg0: i32) -> (i32, i32) {
    %c0_i32 = arith.constant 0 : i32
    %c0_i32_0 = arith.constant 0 : i32
    %c0_i32_1 = arith.constant 0 : i32
    return %c0_i32, %c0_i32_0 : i32, i32
  }
  func.func @transform_18(%arg0: i32) -> (i32, i32) {
    %c0_i32 = arith.constant 0 : i32
    %c0_i32_0 = arith.constant 0 : i32
    %c0_i32_1 = arith.constant 0 : i32
    return %c0_i32, %c0_i32_0 : i32, i32
  }
}

</mosaic_0001>

<llo_original>
// kernel: tpu_custom_call.1
$region0: #{tpu_custom_call.1}
  #allocation0 [shape = 'u32[]', space=smem, size = 0x4, offset = 0x4, fixed_abs, tag = 'smem constant byte address 0x4 - core index']
  #allocation1 [shape = 'u32[72,128]{1,0:T(1,128)}', space=vmem, size = 0x9000, scoped, tag = 'internal scratch']
  %s0 = inlined_call_operand.vmem [shape: f32[32,6], index: 0, kind: input, shape index: {}]
  %s1 = inlined_call_operand.vmem [shape: f32[32,8], index: 1, kind: input, shape index: {}]
  %s2 = inlined_call_operand.vmem [shape: f32[6,10], index: 2, kind: input, shape index: {}]
  %s3 = inlined_call_operand.vmem [shape: f32[1,10], index: 3, kind: input, shape index: {}]
  %s4 = inlined_call_operand.vmem [shape: f32[10,16], index: 4, kind: input, shape index: {}]
  %s5 = inlined_call_operand.vmem [shape: f32[6,16], index: 5, kind: input, shape index: {}]
  %s6 = inlined_call_operand.vmem [shape: f32[1,16], index: 6, kind: input, shape index: {}]
  %s7 = inlined_call_operand.vmem [shape: f32[10,16], index: 7, kind: input, shape index: {}]
  %s8 = inlined_call_operand.vmem [shape: f32[6,16], index: 8, kind: input, shape index: {}]
  %s9 = inlined_call_operand.vmem [shape: f32[1,16], index: 9, kind: input, shape index: {}]
  %s10 = inlined_call_operand.vmem [shape: f32[8,16], index: 10, kind: input, shape index: {}]
  %s11 = inlined_call_operand.vmem [shape: f32[8,6], index: 11, kind: input, shape index: {}]
  %s12 = inlined_call_operand.vmem [shape: f32[1,6], index: 12, kind: input, shape index: {}]
  %s13 = inlined_call_operand.vmem [shape: f32[1,8], index: 13, kind: input, shape index: {}]
  %s14 = inlined_call_operand.vmem [shape: f32[1,8], index: 14, kind: input, shape index: {}]
  %s15 = inlined_call_operand.vmem [shape: f32[1,8], index: 15, kind: input, shape index: {}]
  %s16 = inlined_call_operand.vmem [shape: f32[1,8], index: 16, kind: input, shape index: {}]
  %s17 = inlined_call_operand.hbm [shape: f32[1,1], index: 17, kind: output, shape index: {0}]
  %s18 = inlined_call_operand.hbm [shape: f32[1,1], index: 18, kind: output, shape index: {1}]
  %19 = xla_tuple %s17, %s18
  %s20 = sld [smem:[#allocation0]]
  $region86: #{tpu_custom_call.1} parent=0
    _
  %s22 = ssub.s32 1, %s20
  %s23 = scalar_select 0, %s22, %s20
  $region1: #{tpu_custom_call.1} parent=0
    #allocation2 [shape = 'u8[512]{0}', space=vmem, size = 0x400, scoped, tag = 'output window, operand 0, single buffered']
    #allocation3 [shape = 's32[1]{0}', space=sflag, size = 0x4, scoped, tag = 'scoped memory for tpu_custom_call.1']
    #allocation4 [shape = 'u8[512]{0}', space=vmem, size = 0x400, scoped, tag = 'output window, operand 1, single buffered']
    #allocation5 [shape = 's32[1]{0}', space=sflag, size = 0x4, scoped, tag = 'scoped memory for tpu_custom_call.1']
    %24 = vsyncpa [#allocation3], 0
    %25 = vsyncpa [#allocation5], 0
    // Predicated region
    $region2: #{tpu_custom_call.1} parent=1 // pred_check
      _
    $region3: #{tpu_custom_call.1} parent=1 // pred_check_branch
      %27 = sbr.rel (0) target = $region5
    $region4: #{tpu_custom_call.1} parent=1 // pred_region
      _
    $region5: #{tpu_custom_call.1} parent=1 // pred_fallthru
      _
    // Predicated region
    $region6: #{tpu_custom_call.1} parent=1 // pred_check
      _
    $region7: #{tpu_custom_call.1} parent=1 // pred_check_branch
      %29 = sbr.rel (0) target = $region9
    $region8: #{tpu_custom_call.1} parent=1 // pred_region
      _
    $region9: #{tpu_custom_call.1} parent=1 // pred_fallthru
      _
    // Predicated region
    $region10: #{tpu_custom_call.1} parent=1 // pred_check
      _
    $region11: #{tpu_custom_call.1} parent=1 // pred_check_branch
      %31 = sbr.rel (0) target = $region13
    $region12: #{tpu_custom_call.1} parent=1 // pred_region
      _
    $region13: #{tpu_custom_call.1} parent=1 // pred_fallthru
      _
    // Predicated region
    $region14: #{tpu_custom_call.1} parent=1 // pred_check
      _
    $region15: #{tpu_custom_call.1} parent=1 // pred_check_branch
      %33 = sbr.rel (0) target = $region17
    $region16: #{tpu_custom_call.1} parent=1 // pred_region
      _
    $region17: #{tpu_custom_call.1} parent=1 // pred_fallthru
      _
    // Predicated region
    $region18: #{tpu_custom_call.1} parent=1 // pred_check
      _
    $region19: #{tpu_custom_call.1} parent=1 // pred_check_branch
      %35 = sbr.rel (0) target = $region21
    $region20: #{tpu_custom_call.1} parent=1 // pred_region
      _
    $region21: #{tpu_custom_call.1} parent=1 // pred_fallthru
      _
    // Predicated region
    $region22: #{tpu_custom_call.1} parent=1 // pred_check
      _
    $region23: #{tpu_custom_call.1} parent=1 // pred_check_branch
      %37 = sbr.rel (0) target = $region25
    $region24: #{tpu_custom_call.1} parent=1 // pred_region
      _
    $region25: #{tpu_custom_call.1} parent=1 // pred_fallthru
      _
    // Predicated region
    $region26: #{tpu_custom_call.1} parent=1 // pred_check
      _
    $region27: #{tpu_custom_call.1} parent=1 // pred_check_branch
      %39 = sbr.rel (0) target = $region29
    $region28: #{tpu_custom_call.1} parent=1 // pred_region
      _
    $region29: #{tpu_custom_call.1} parent=1 // pred_fallthru
      _
    // Predicated region
    $region30: #{tpu_custom_call.1} parent=1 // pred_check
      _
    $region31: #{tpu_custom_call.1} parent=1 // pred_check_branch
      %41 = sbr.rel (0) target = $region33
    $region32: #{tpu_custom_call.1} parent=1 // pred_region
      _
    $region33: #{tpu_custom_call.1} parent=1 // pred_fallthru
      _
    // Predicated region
    $region34: #{tpu_custom_call.1} parent=1 // pred_check
      _
    $region35: #{tpu_custom_call.1} parent=1 // pred_check_branch
      %43 = sbr.rel (0) target = $region37
    $region36: #{tpu_custom_call.1} parent=1 // pred_region
      _
    $region37: #{tpu_custom_call.1} parent=1 // pred_fallthru
      _
    // Predicated region
    $region38: #{tpu_custom_call.1} parent=1 // pred_check
      _
    $region39: #{tpu_custom_call.1} parent=1 // pred_check_branch
      %45 = sbr.rel (0) target = $region41
    $region40: #{tpu_custom_call.1} parent=1 // pred_region
      _
    $region41: #{tpu_custom_call.1} parent=1 // pred_fallthru
      _
    // Predicated region
    $region42: #{tpu_custom_call.1} parent=1 // pred_check
      _
    $region43: #{tpu_custom_call.1} parent=1 // pred_check_branch
      %47 = sbr.rel (0) target = $region45
    $region44: #{tpu_custom_call.1} parent=1 // pred_region
      _
    $region45: #{tpu_custom_call.1} parent=1 // pred_fallthru
      _
    // Predicated region
    $region46: #{tpu_custom_call.1} parent=1 // pred_check
      _
    $region47: #{tpu_custom_call.1} parent=1 // pred_check_branch
      %49 = sbr.rel (0) target = $region49
    $region48: #{tpu_custom_call.1} parent=1 // pred_region
      _
    $region49: #{tpu_custom_call.1} parent=1 // pred_fallthru
      _
    // Predicated region
    $region50: #{tpu_custom_call.1} parent=1 // pred_check
      _
    $region51: #{tpu_custom_call.1} parent=1 // pred_check_branch
      %51 = sbr.rel (0) target = $region53
    $region52: #{tpu_custom_call.1} parent=1 // pred_region
      _
    $region53: #{tpu_custom_call.1} parent=1 // pred_fallthru
      _
    // Predicated region
    $region54: #{tpu_custom_call.1} parent=1 // pred_check
      _
    $region55: #{tpu_custom_call.1} parent=1 // pred_check_branch
      %53 = sbr.rel (0) target = $region57
    $region56: #{tpu_custom_call.1} parent=1 // pred_region
      _
    $region57: #{tpu_custom_call.1} parent=1 // pred_fallthru
      _
    // Predicated region
    $region58: #{tpu_custom_call.1} parent=1 // pred_check
      _
    $region59: #{tpu_custom_call.1} parent=1 // pred_check_branch
      %55 = sbr.rel (0) target = $region61
    $region60: #{tpu_custom_call.1} parent=1 // pred_region
      _
    $region61: #{tpu_custom_call.1} parent=1 // pred_fallthru
      _
    // Predicated region
    $region62: #{tpu_custom_call.1} parent=1 // pred_check
      _
    $region63: #{tpu_custom_call.1} parent=1 // pred_check_branch
      %57 = sbr.rel (0) target = $region65
    $region64: #{tpu_custom_call.1} parent=1 // pred_region
      _
    $region65: #{tpu_custom_call.1} parent=1 // pred_fallthru
      _
    // Predicated region
    $region66: #{tpu_custom_call.1} parent=1 // pred_check
      _
    $region67: #{tpu_custom_call.1} parent=1 // pred_check_branch
      %59 = sbr.rel (0) target = $region69
    $region68: #{tpu_custom_call.1} parent=1 // pred_region
      _
    $region69: #{tpu_custom_call.1} parent=1 // pred_fallthru
      _
    %v60 = vld [vmem:[%s0] sm:$0xff]
    %v61 = vld [vmem:[%s0 + $0x8] sm:$0xff]
    %v62 = vld [vmem:[%s0 + $0x10] sm:$0xff]
    %v63 = vld [vmem:[%s0 + $0x18] sm:$0xff]
    %v64 = vld [vmem:[%s1] sm:$0xff]
    %v65 = vld [vmem:[%s1 + $0x8] sm:$0xff]
    %v66 = vld [vmem:[%s1 + $0x10] sm:$0xff]
    %v67 = vld [vmem:[%s1 + $0x18] sm:$0xff]
    %v68 = vld [vmem:[%s2] sm:$0x3f]
    %v69 = vld [vmem:[%s3] sm:$0x1]
    %v71 = vperm.slane %v69, 0
    %vm73 = vcmask 48128
    %v75 = vsel %vm73, %v60, 0
    %v78 = vsel %vm73, %v61, 0
    %v81 = vsel %vm73, %v62, 0
    %v84 = vsel %vm73, %v63, 0
    %vm86 = vcmask 1045504
    %v88 = vsel %vm86, %v68, 0
    %90 = vmatpush.msra.mxu0 0.0
    %91 = vmatpush.msra.mxu0 0.0
    %92 = vmatpush.msra.mxu0 0.0
    %93 = vmatpush.msra.mxu0 0.0
    %94 = vmatpush.msra.mxu0 0.0
    %95 = vmatpush.msra.mxu0 0.0
    %96 = vmatpush.msra.mxu0 0.0
    %97 = vmatpush.msra.mxu0 0.0
    %98 = vmatpush.msra.mxu0 0.0
    %99 = vmatpush.msra.mxu0 0.0
    %100 = vmatpush.msra.mxu0 0.0
    %101 = vmatpush.msra.mxu0 0.0
    %102 = vmatpush.msra.mxu0 0.0
    %103 = vmatpush.msra.mxu0 0.0
    %104 = vmatpush.msra.mxu0 0.0
    %105 = vmatpush.msra.mxu0 %v88
    %106 = vmatmul.f32.gmra.mxu0 %v75
    %v107 = vpop.f32.mrf.mxu0
    %v108 = vadd.f32 %v71, %v107
    %109 = vmatmul.f32.gmra.mxu0 %v78
    %v110 = vpop.f32.mrf.mxu0
    %v111 = vadd.f32 %v71, %v110
    %112 = vmatmul.f32.gmra.mxu0 %v81
    %v113 = vpop.f32.mrf.mxu0
    %v114 = vadd.f32 %v71, %v113
    %115 = vmatmul.f32.gmra.mxu0 %v84
    %v116 = vpop.f32.mrf.mxu0
    %v117 = vadd.f32 %v71, %v116
    %118 = vdwg.mxu0
    %v119 = vld [vmem:[%s4] sm:$0xff]
    %v120 = vld [vmem:[%s4 + $0x8] sm:$0x3]
    %v121 = vld [vmem:[%s5] sm:$0x3f]
    %v123 = vsel %vm86, %v121, 0
    %125 = vmatpush.msra.mxu0 0.0
    %126 = vmatpush.msra.mxu0 0.0
    %127 = vmatpush.msra.mxu0 0.0
    %128 = vmatpush.msra.mxu0 0.0
    %129 = vmatpush.msra.mxu0 0.0
    %130 = vmatpush.msra.mxu0 0.0
    %131 = vmatpush.msra.mxu0 0.0
    %132 = vmatpush.msra.mxu0 0.0
    %133 = vmatpush.msra.mxu0 0.0
    %134 = vmatpush.msra.mxu0 0.0
    %135 = vmatpush.msra.mxu0 0.0
    %136 = vmatpush.msra.mxu0 0.0
    %137 = vmatpush.msra.mxu0 0.0
    %138 = vmatpush.msra.mxu0 0.0
    %139 = vmatpush.msra.mxu0 0.0
    %140 = vmatpush.msra.mxu0 %v123
    %141 = vmatmul.f32.gmra.mxu0 %v75
    %v142 = vpop.f32.mrf.mxu0
    %v143 = vadd.f32 0.0, %v142
    %144 = vdwg.mxu0
    %vm145 = vcmask 80896
    %v147 = vsel %vm145, %v108, 0
    %vm149 = vcmask 1041408
    %v151 = vsel %vm149, %v120, 0
    %153 = vmatpush.msra.mxu0 0.0
    %154 = vmatpush.msra.mxu0 0.0
    %155 = vmatpush.msra.mxu0 0.0
    %156 = vmatpush.msra.mxu0 0.0
    %157 = vmatpush.msra.mxu0 0.0
    %158 = vmatpush.msra.mxu0 0.0
    %159 = vmatpush.msra.mxu0 0.0
    %160 = vmatpush.msra.mxu0 0.0
    %161 = vmatpush.msra.mxu0 0.0
    %162 = vmatpush.msra.mxu0 0.0
    %163 = vmatpush.msra.mxu0 0.0
    %164 = vmatpush.msra.mxu0 0.0
    %165 = vmatpush.msra.mxu0 0.0
    %166 = vmatpush.msra.mxu0 0.0
    %167 = vmatpush.msra.mxu0 %v151
    %168 = vmatpush.msra.mxu0 %v119
    %169 = vmatmul.f32.gmra.mxu0 %v147
    %v170 = vpop.f32.mrf.mxu0
    %v171 = vadd.f32 %v143, %v170
    %172 = vdwg.mxu0
    %v173 = vld [vmem:[%s6] sm:$0x1]
    %v175 = vperm.slane %v173, 0
    %v177 = vadd.f32 %v171, %v175
    %v178 = vmul.f32 %v177, 1.442695
    %v179 = vpow.pop %v178
    %v180 = vld [vmem:[%s7] sm:$0xff]
    %v181 = vld [vmem:[%s7 + $0x8] sm:$0x3]
    %v182 = vld [vmem:[%s8] sm:$0x3f]
    %v184 = vsel %vm86, %v182, 0
    %186 = vmatpush.msra.mxu0 0.0
    %187 = vmatpush.msra.mxu0 0.0
    %188 = vmatpush.msra.mxu0 0.0
    %189 = vmatpush.msra.mxu0 0.0
    %190 = vmatpush.msra.mxu0 0.0
    %191 = vmatpush.msra.mxu0 0.0
    %192 = vmatpush.msra.mxu0 0.0
    %193 = vmatpush.msra.mxu0 0.0
    %194 = vmatpush.msra.mxu0 0.0
    %195 = vmatpush.msra.mxu0 0.0
    %196 = vmatpush.msra.mxu0 0.0
    %197 = vmatpush.msra.mxu0 0.0
    %198 = vmatpush.msra.mxu0 0.0
    %199 = vmatpush.msra.mxu0 0.0
    %200 = vmatpush.msra.mxu0 0.0
    %201 = vmatpush.msra.mxu0 %v184
    %202 = vmatmul.f32.gmra.mxu0 %v75
    %v203 = vpop.f32.mrf.mxu0
    %v204 = vadd.f32 0.0, %v203
    %205 = vmatmul.f32.gmra.mxu0 %v78
    %v206 = vpop.f32.mrf.mxu0
    %v207 = vadd.f32 0.0, %v206
    %208 = vmatmul.f32.gmra.mxu0 %v81
    %v209 = vpop.f32.mrf.mxu0
    %v210 = vadd.f32 0.0, %v209
    %211 = vmatmul.f32.gmra.mxu0 %v84
    %v212 = vpop.f32.mrf.mxu0
    %v213 = vadd.f32 0.0, %v212
    %214 = vdwg.mxu0
    %v216 = vsel %vm145, %v111, 0
    %v219 = vsel %vm145, %v114, 0
    %v222 = vsel %vm145, %v117, 0
    %v225 = vsel %vm149, %v181, 0
    %227 = vmatpush.msra.mxu0 0.0
    %228 = vmatpush.msra.mxu0 0.0
    %229 = vmatpush.msra.mxu0 0.0
    %230 = vmatpush.msra.mxu0 0.0
    %231 = vmatpush.msra.mxu0 0.0
    %232 = vmatpush.msra.mxu0 0.0
    %233 = vmatpush.msra.mxu0 0.0
    %234 = vmatpush.msra.mxu0 0.0
    %235 = vmatpush.msra.mxu0 0.0
    %236 = vmatpush.msra.mxu0 0.0
    %237 = vmatpush.msra.mxu0 0.0
    %238 = vmatpush.msra.mxu0 0.0
    %239 = vmatpush.msra.mxu0 0.0
    %240 = vmatpush.msra.mxu0 0.0
    %241 = vmatpush.msra.mxu0 %v225
    %242 = vmatpush.msra.mxu0 %v180
    %243 = vmatmul.f32.gmra.mxu0 %v147
    %v244 = vpop.f32.mrf.mxu0
    %v245 = vadd.f32 %v204, %v244
    %246 = vmatmul.f32.gmra.mxu0 %v216
    %v247 = vpop.f32.mrf.mxu0
    %v248 = vadd.f32 %v207, %v247
    %249 = vmatmul.f32.gmra.mxu0 %v219
    %v250 = vpop.f32.mrf.mxu0
    %v251 = vadd.f32 %v210, %v250
    %252 = vmatmul.f32.gmra.mxu0 %v222
    %v253 = vpop.f32.mrf.mxu0
    %v254 = vadd.f32 %v213, %v253
    %255 = vdwg.mxu0
    %v256 = vld [vmem:[%s9] sm:$0x1]
    %v258 = vperm.slane %v256, 0
    %v260 = vadd.f32 %v245, %v258
    %v261 = vadd.f32 %v248, %v258
    %v262 = vadd.f32 %v251, %v258
    %v263 = vadd.f32 %v254, %v258
    %v264 = vld [vmem:[%s13] sm:$0x1]
    %v265 = vand.u32 2147483647, %v264
    %vm266 = vcmp.gt.f32.partialorder %v265, 1e-07
    %vm267 = vcmp.ge.f32.partialorder %v264, 0.0
    %v268 = vsel %vm267, 1e-07, -1e-07
    %v269 = vsel %vm266, %v264, %v268
    %v270 = vrcp.pop %v269
    %v271 = vmul.f32 %v269, %v270
    %v272 = vsub.f32 1.0, %v271
    %v273 = vmul.f32 %v270, %v272
    %v274 = vadd.f32 %v270, %v273
    %vm275 = vweird.f32 %v269
    %vm276 = vweird.f32 %v270
    %vm277 = vmor %vm275, %vm276
    %v278 = vsel %vm277, %v270, %v274
    %v279 = vand.u32 2147483647, %v269
    %vm280 = vcmp.eq.f32.partialorder %v279, 8.507059e+37
    %v281 = vand.u32 %v269, 2147483648
    %v282 = vor.u32 1.1754944e-38, %v281
    %v283 = vsel %vm280, %v282, %v278
    %v284 = vmul.f32 1.0, %v283
    %v285 = vmul.f32 %v284, %v284
    %v286 = vmul.f32 %v264, 0.31622776
    %v288 = vperm.slane %v286, 0
    %v290 = vmul.f32 %v64, %v288
    %v291 = vmul.f32 %v65, %v288
    %v292 = vmul.f32 %v66, %v288
    %v293 = vmul.f32 %v67, %v288
    %295 = vrot.lane.b32.xlu0 %v64, 8
    %v296 = vpop.permute.xlu0 %295
    %v298 = vmul.f32 %v179, %v296
    %300 = vrot.lane.b32.xlu0 %v298, 120
    %v301 = vpop.permute.xlu0 %300
    %v303 = vadd.f32 %v177, %v301
    %v304 = vld [vmem:[%s10] sm:$0xff]
    %v306 = vrot.slane %v260, 4
    %vm308 = vcmask 64512
    %v310 = vsel %vm308, %v303, 0
    %312 = vmatpush.msra.mxu0 0.0
    %313 = vmatpush.msra.mxu0 0.0
    %314 = vmatpush.msra.mxu0 0.0
    %315 = vmatpush.msra.mxu0 0.0
    %316 = vmatpush.msra.mxu0 0.0
    %317 = vmatpush.msra.mxu0 0.0
    %318 = vmatpush.msra.mxu0 0.0
    %319 = vmatpush.msra.mxu0 0.0
    %320 = vmatpush.msra.mxu0 0.0
    %321 = vmatpush.msra.mxu0 0.0
    %322 = vmatpush.msra.mxu0 0.0
    %323 = vmatpush.msra.mxu0 0.0
    %324 = vmatpush.msra.mxu0 0.0
    %325 = vmatpush.msra.mxu0 0.0
    %326 = vmatpush.msra.mxu0 0.0
    %327 = vmatpush.msra.mxu0 %v304
    %328 = vmatmul.f32.gmra.mxu0 %v310
    %v329 = vpop.f32.mrf.mxu0
    %v330 = vadd.f32 %v306, %v329
    %331 = vdwg.mxu0
    %v332 = vmul.f32 %v330, %v330
    %v333 = vadd.f32 %v332, 0.0
    %v334 = vmul.f32 %v330, 0.1
    %v335 = vadd.f32 %v303, %v334
    %v337 = vrot.slane %v290, 4
    %v339 = vadd.f32 %v335, %v337
    %v341 = vsel %vm308, %v339, 0
    %343 = vmatpush.msra.mxu0 0.0
    %344 = vmatpush.msra.mxu0 0.0
    %345 = vmatpush.msra.mxu0 0.0
    %346 = vmatpush.msra.mxu0 0.0
    %347 = vmatpush.msra.mxu0 0.0
    %348 = vmatpush.msra.mxu0 0.0
    %349 = vmatpush.msra.mxu0 0.0
    %350 = vmatpush.msra.mxu0 0.0
    %351 = vmatpush.msra.mxu0 0.0
    %352 = vmatpush.msra.mxu0 0.0
    %353 = vmatpush.msra.mxu0 0.0
    %354 = vmatpush.msra.mxu0 0.0
    %355 = vmatpush.msra.mxu0 0.0
    %356 = vmatpush.msra.mxu0 0.0
    %357 = vmatpush.msra.mxu0 0.0
    %358 = vmatpush.msra.mxu0 %v304
    %359 = vmatmul.f32.gmra.mxu0 %v341
    %v360 = vpop.f32.mrf.mxu0
    %v361 = vadd.f32 %v261, %v360
    %362 = vdwg.mxu0
    %v363 = vmul.f32 %v361, %v361
    %v364 = vadd.f32 %v333, %v363
    %v365 = vmul.f32 %v361, 0.1
    %v366 = vadd.f32 %v339, %v365
    %v367 = vadd.f32 %v366, %v291
    %v369 = vrot.slane %v261, 4
    %v372 = vsel %vm308, %v367, 0
    %374 = vmatpush.msra.mxu0 0.0
    %375 = vmatpush.msra.mxu0 0.0
    %376 = vmatpush.msra.mxu0 0.0
    %377 = vmatpush.msra.mxu0 0.0
    %378 = vmatpush.msra.mxu0 0.0
    %379 = vmatpush.msra.mxu0 0.0
    %380 = vmatpush.msra.mxu0 0.0
    %381 = vmatpush.msra.mxu0 0.0
    %382 = vmatpush.msra.mxu0 0.0
    %383 = vmatpush.msra.mxu0 0.0
    %384 = vmatpush.msra.mxu0 0.0
    %385 = vmatpush.msra.mxu0 0.0
    %386 = vmatpush.msra.mxu0 0.0
    %387 = vmatpush.msra.mxu0 0.0
    %388 = vmatpush.msra.mxu0 0.0
    %389 = vmatpush.msra.mxu0 %v304
    %390 = vmatmul.f32.gmra.mxu0 %v372
    %v391 = vpop.f32.mrf.mxu0
    %v392 = vadd.f32 %v369, %v391
    %393 = vdwg.mxu0
    %v394 = vmul.f32 %v392, %v392
    %v395 = vadd.f32 %v364, %v394
    %v396 = vmul.f32 %v392, 0.1
    %v397 = vadd.f32 %v367, %v396
    %v399 = vrot.slane %v291, 4
    %v401 = vadd.f32 %v397, %v399
    %v403 = vsel %vm308, %v401, 0
    %405 = vmatpush.msra.mxu0 0.0
    %406 = vmatpush.msra.mxu0 0.0
    %407 = vmatpush.msra.mxu0 0.0
    %408 = vmatpush.msra.mxu0 0.0
    %409 = vmatpush.msra.mxu0 0.0
    %410 = vmatpush.msra.mxu0 0.0
    %411 = vmatpush.msra.mxu0 0.0
    %412 = vmatpush.msra.mxu0 0.0
    %413 = vmatpush.msra.mxu0 0.0
    %414 = vmatpush.msra.mxu0 0.0
    %415 = vmatpush.msra.mxu0 0.0
    %416 = vmatpush.msra.mxu0 0.0
    %417 = vmatpush.msra.mxu0 0.0
    %418 = vmatpush.msra.mxu0 0.0
    %419 = vmatpush.msra.mxu0 0.0
    %420 = vmatpush.msra.mxu0 %v304
    %421 = vmatmul.f32.gmra.mxu0 %v403
    %v422 = vpop.f32.mrf.mxu0
    %v423 = vadd.f32 %v262, %v422
    %424 = vdwg.mxu0
    %v425 = vmul.f32 %v423, %v423
    %v426 = vadd.f32 %v395, %v425
    %v427 = vmul.f32 %v423, 0.1
    %v428 = vadd.f32 %v401, %v427
    %v429 = vadd.f32 %v428, %v292
    %v431 = vrot.slane %v262, 4
    %v434 = vsel %vm308, %v429, 0
    %436 = vmatpush.msra.mxu0 0.0
    %437 = vmatpush.msra.mxu0 0.0
    %438 = vmatpush.msra.mxu0 0.0
    %439 = vmatpush.msra.mxu0 0.0
    %440 = vmatpush.msra.mxu0 0.0
    %441 = vmatpush.msra.mxu0 0.0
    %442 = vmatpush.msra.mxu0 0.0
    %443 = vmatpush.msra.mxu0 0.0
    %444 = vmatpush.msra.mxu0 0.0
    %445 = vmatpush.msra.mxu0 0.0
    %446 = vmatpush.msra.mxu0 0.0
    %447 = vmatpush.msra.mxu0 0.0
    %448 = vmatpush.msra.mxu0 0.0
    %449 = vmatpush.msra.mxu0 0.0
    %450 = vmatpush.msra.mxu0 0.0
    %451 = vmatpush.msra.mxu0 %v304
    %452 = vmatmul.f32.gmra.mxu0 %v434
    %v453 = vpop.f32.mrf.mxu0
    %v454 = vadd.f32 %v431, %v453
    %455 = vdwg.mxu0
    %v456 = vmul.f32 %v454, %v454
    %v457 = vadd.f32 %v426, %v456
    %v458 = vmul.f32 %v454, 0.1
    %v459 = vadd.f32 %v429, %v458
    %v461 = vrot.slane %v292, 4
    %v463 = vadd.f32 %v459, %v461
    %v465 = vsel %vm308, %v463, 0
    %467 = vmatpush.msra.mxu0 0.0
    %468 = vmatpush.msra.mxu0 0.0
    %469 = vmatpush.msra.mxu0 0.0
    %470 = vmatpush.msra.mxu0 0.0
    %471 = vmatpush.msra.mxu0 0.0
    %472 = vmatpush.msra.mxu0 0.0
    %473 = vmatpush.msra.mxu0 0.0
    %474 = vmatpush.msra.mxu0 0.0
    %475 = vmatpush.msra.mxu0 0.0
    %476 = vmatpush.msra.mxu0 0.0
    %477 = vmatpush.msra.mxu0 0.0
    %478 = vmatpush.msra.mxu0 0.0
    %479 = vmatpush.msra.mxu0 0.0
    %480 = vmatpush.msra.mxu0 0.0
    %481 = vmatpush.msra.mxu0 0.0
    %482 = vmatpush.msra.mxu0 %v304
    %483 = vmatmul.f32.gmra.mxu0 %v465
    %v484 = vpop.f32.mrf.mxu0
    %v485 = vadd.f32 %v263, %v484
    %486 = vdwg.mxu0
    %v487 = vmul.f32 %v485, %v485
    %v488 = vadd.f32 %v457, %v487
    %v489 = vmul.f32 %v485, 0.1
    %v490 = vadd.f32 %v463, %v489
    %v491 = vadd.f32 %v490, %v293
    %v493 = vrot.slane %v263, 4
    %v496 = vsel %vm308, %v491, 0
    %498 = vmatpush.msra.mxu0 0.0
    %499 = vmatpush.msra.mxu0 0.0
    %500 = vmatpush.msra.mxu0 0.0
    %501 = vmatpush.msra.mxu0 0.0
    %502 = vmatpush.msra.mxu0 0.0
    %503 = vmatpush.msra.mxu0 0.0
    %504 = vmatpush.msra.mxu0 0.0
    %505 = vmatpush.msra.mxu0 0.0
    %506 = vmatpush.msra.mxu0 0.0
    %507 = vmatpush.msra.mxu0 0.0
    %508 = vmatpush.msra.mxu0 0.0
    %509 = vmatpush.msra.mxu0 0.0
    %510 = vmatpush.msra.mxu0 0.0
    %511 = vmatpush.msra.mxu0 0.0
    %512 = vmatpush.msra.mxu0 0.0
    %513 = vmatpush.msra.mxu0 %v304
    %514 = vmatmul.f32.gmra.mxu0 %v496
    %v515 = vpop.f32.mrf.mxu0
    %v516 = vadd.f32 %v493, %v515
    %517 = vdwg.mxu0
    %v518 = vmul.f32 %v516, %v516
    %v519 = vadd.f32 %v488, %v518
    %v520 = vmul.f32 %v516, 0.1
    %v521 = vadd.f32 %v491, %v520
    %v523 = vrot.slane %v293, 4
    %v525 = vadd.f32 %v521, %v523
    %v526 = vrot.slane %v339, 4
    %v528 = vrot.slane %v401, 4
    %v530 = vrot.slane %v463, 4
    %v533 = vrot.slane %v525, 4
    %vm535 = vcmask 1043456
    %v536 = vsel %vm535, %v303, %v526
    %v537 = vsel %vm535, %v367, %v528
    %v538 = vsel %vm535, %v429, %v530
    %v539 = vsel %vm535, %v491, %v533
    %v540 = vld [vmem:[%s11] sm:$0xff]
    %v541 = vld [vmem:[%s12] sm:$0x1]
    %v543 = vperm.slane %v541, 0
    %v546 = vsel %vm308, %v536, 0
    %v549 = vsel %vm308, %v537, 0
    %v552 = vsel %vm308, %v538, 0
    %v555 = vsel %vm308, %v539, 0
    %557 = vmatpush.msra.mxu0 0.0
    %558 = vmatpush.msra.mxu0 0.0
    %559 = vmatpush.msra.mxu0 0.0
    %560 = vmatpush.msra.mxu0 0.0
    %561 = vmatpush.msra.mxu0 0.0
    %562 = vmatpush.msra.mxu0 0.0
    %563 = vmatpush.msra.mxu0 0.0
    %564 = vmatpush.msra.mxu0 0.0
    %565 = vmatpush.msra.mxu0 0.0
    %566 = vmatpush.msra.mxu0 0.0
    %567 = vmatpush.msra.mxu0 0.0
    %568 = vmatpush.msra.mxu0 0.0
    %569 = vmatpush.msra.mxu0 0.0
    %570 = vmatpush.msra.mxu0 0.0
    %571 = vmatpush.msra.mxu0 0.0
    %572 = vmatpush.msra.mxu0 %v540
    %573 = vmatmul.f32.gmra.mxu0 %v546
    %v574 = vpop.f32.mrf.mxu0
    %v575 = vadd.f32 %v543, %v574
    %576 = vmatmul.f32.gmra.mxu0 %v549
    %v577 = vpop.f32.mrf.mxu0
    %v578 = vadd.f32 %v543, %v577
    %579 = vmatmul.f32.gmra.mxu0 %v552
    %v580 = vpop.f32.mrf.mxu0
    %v581 = vadd.f32 %v543, %v580
    %582 = vmatmul.f32.gmra.mxu0 %v555
    %v583 = vpop.f32.mrf.mxu0
    %v584 = vadd.f32 %v543, %v583
    %585 = vdwg.mxu0
    %v586 = vsub.f32 %v60, %v575
    %v587 = vsub.f32 %v61, %v578
    %v588 = vsub.f32 %v62, %v581
    %v589 = vsub.f32 %v63, %v584
    %v590 = vmul.f32 %v586, -0.5
    %v591 = vmul.f32 %v587, -0.5
    %v592 = vmul.f32 %v588, -0.5
    %v593 = vmul.f32 %v589, -0.5
    %v594 = vmul.f32 %v590, %v586
    %v595 = vmul.f32 %v591, %v587
    %v596 = vmul.f32 %v592, %v588
    %v597 = vmul.f32 %v593, %v589
    %v598 = vmul.f32 %v594, 100.0
    %v599 = vmul.f32 %v595, 100.0
    %v600 = vmul.f32 %v596, 100.0
    %v601 = vmul.f32 %v597, 100.0
    %v602 = vsub.f32 %v598, -2.3025851
    %v603 = vsub.f32 %v599, -2.3025851
    %v604 = vsub.f32 %v600, -2.3025851
    %v605 = vsub.f32 %v601, -2.3025851
    %v606 = vsub.f32 %v602, 0.9189385
    %v607 = vsub.f32 %v603, 0.9189385
    %v608 = vsub.f32 %v604, 0.9189385
    %v609 = vsub.f32 %v605, 0.9189385
    %v610 = vsel %vm73, %v606, 0.0
    %611 = vadd.xlane.f32.xlu0 %v610
    %v612 = vpop.xlane.xlu0 %611
    %v613 = vsel %vm73, %v607, 0.0
    %614 = vadd.xlane.f32.xlu0 %v613
    %v615 = vpop.xlane.xlu0 %614
    %v616 = vsel %vm73, %v608, 0.0
    %617 = vadd.xlane.f32.xlu0 %v616
    %v618 = vpop.xlane.xlu0 %617
    %v619 = vsel %vm73, %v609, 0.0
    %620 = vadd.xlane.f32.xlu0 %v619
    %v621 = vpop.xlane.xlu0 %620
    %v622 = vadd.f32 %v612, %v615
    %v623 = vadd.f32 %v622, %v618
    %v624 = vadd.f32 %v623, %v621
    %v625 = vrot.slane %v624, 4
    %v626 = vadd.f32 %v624, %v625
    %v627 = vrot.slane %v626, 2
    %v628 = vadd.f32 %v626, %v627
    %v629 = vrot.slane %v628, 1
    %v630 = vadd.f32 %v628, %v629
    %v631 = vsub.f32 0.0, %v630
    %v632 = vmul.f32 %v631, 0.25
    %vm633 = vcmask 0
    %634 = vst.msk [vmem:[#allocation2] sm:$0x1] %vm633, %v632
    %v635 = vmul.f32 %v179, %v179
    %v636 = vld [vmem:[%s15] sm:$0x1]
    %v638 = vperm.slane %v636, 0
    %641 = vrot.lane.b32.xlu0 %v177, 120
    %v642 = vpop.permute.xlu0 %641
    %v644 = vsub.f32 %v638, %v642
    %v645 = vld [vmem:[%s14] sm:$0x1]
    %v647 = vperm.slane %v645, 0
    %v649 = vsub.f32 %v177, %v647
    %v650 = vmul.f32 %v649, %v649
    %652 = vrot.lane.b32.xlu0 %v650, 8
    %v653 = vpop.permute.xlu0 %652
    %v655 = vadd.f32 %v635, %v653
    %v656 = vld [vmem:[%s16] sm:$0x1]
    %v658 = vperm.slane %v656, 0
    %659 = vrot.lane.b32.xlu0 %v658, 8
    %v660 = vpop.permute.xlu0 %659
    %v662 = vmul.f32 %v655, %v660
    %664 = vrot.lane.b32.xlu0 %v662, 120
    %v665 = vpop.permute.xlu0 %664
    %v667 = vadd.f32 %v644, %v665
    %v668 = vsub.f32 %v667, 0.5
    %v669 = vmul.f32 %v285, 0.1
    %v671 = vperm.slane %v669, 0
    %672 = vrot.lane.b32.xlu0 %v671, 8
    %v673 = vpop.permute.xlu0 %672
    %v675 = vmul.f32 %v519, %v673
    %677 = vrot.lane.b32.xlu0 %v675, 120
    %v678 = vpop.permute.xlu0 %677
    %v680 = vadd.f32 %v668, %v678
    %vm681 = vcmask 60416
    %v682 = vsel %vm681, %v680, 0.0
    %683 = vadd.xlane.f32.xlu0 %v682
    %v684 = vpop.xlane.xlu0 %683
    %v685 = vsel %vm535, %v684, 0.0
    %v686 = vrot.slane %v685, 4
    %v687 = vadd.f32 %v685, %v686
    %v688 = vrot.slane %v687, 2
    %v689 = vadd.f32 %v687, %v688
    %v690 = vrot.slane %v689, 1
    %v691 = vadd.f32 %v689, %v690
    %v692 = vmul.f32 %v691, 0.25
    %693 = vst.msk [vmem:[#allocation4] sm:$0x1] %vm633, %v692
    // Predicated region
    $region70: #{tpu_custom_call.1} parent=1 // pred_check
      _
    $region71: #{tpu_custom_call.1} parent=1 // pred_check_branch
      %695 = sbr.rel (0) target = $region73
    $region72: #{tpu_custom_call.1} parent=1 // pred_region
      %697 = vsyncadd [#allocation3], 0
      %s699 = sshll.u32 [#allocation2], 4
      %s700 = int_to_ptr.vmem [resolvable:$true] %s699
      %s701 = sshll.u32 %s17, 4
      %s702 = int_to_ptr.hbm [resolvable:$true] %s701
      %704 = dma.vmem_to_hbm [thread:$0]  %s700, 16, %s702, [#allocation3]
    $region73: #{tpu_custom_call.1} parent=1 // pred_fallthru
      _
    // Predicated region
    $region74: #{tpu_custom_call.1} parent=1 // pred_check
      _
    $region75: #{tpu_custom_call.1} parent=1 // pred_check_branch
      %706 = sbr.rel (0) target = $region77
    $region76: #{tpu_custom_call.1} parent=1 // pred_region
      %708 = vsyncadd [#allocation5], 0
      %s710 = sshll.u32 [#allocation4], 4
      %s711 = int_to_ptr.vmem [resolvable:$true] %s710
      %s712 = sshll.u32 %s18, 4
      %s713 = int_to_ptr.hbm [resolvable:$true] %s712
      %715 = dma.vmem_to_hbm [thread:$0]  %s711, 16, %s713, [#allocation5]
    $region77: #{tpu_custom_call.1} parent=1 // pred_fallthru
      _
    // Predicated region
    $region78: #{tpu_custom_call.1} parent=1 // pred_check
      _
    $region79: #{tpu_custom_call.1} parent=1 // pred_check_branch
      %717 = sbr.rel (0) target = $region81
    $region80: #{tpu_custom_call.1} parent=1 // pred_region
      %719 = dma.done [#allocation3], 16
    $region81: #{tpu_custom_call.1} parent=1 // pred_fallthru
      _
    // Predicated region
    $region82: #{tpu_custom_call.1} parent=1 // pred_check
      _
    $region83: #{tpu_custom_call.1} parent=1 // pred_check_branch
      %721 = sbr.rel (0) target = $region85
    $region84: #{tpu_custom_call.1} parent=1 // pred_region
      %723 = dma.done [#allocation5], 16
    $region85: #{tpu_custom_call.1} parent=1 // pred_fallthru
      _
    %724 = vsyncpa [#allocation3], 1
    %725 = vsyncpa [#allocation5], 1

</llo_original>
